<compile_context>
chip_gen: v7x
topology: tpu7x:2x2x1
jax: 0.10.0
libtpu: 0.0.40
codegen_flags: <defaults>
</compile_context>

<pallas_src>
import functools

import jax
import jax.numpy as jnp
from jax import lax
from jax.experimental import pallas as pl
from jax.experimental.pallas import tpu as pltpu


def _in_trust_kernel(logits_ref, labels_ref, out_ref, *, delta):
    i = pl.program_id(1)  # inner (reduction) axis

    @pl.when(i == 0)
    def _():
        out_ref[...] = jnp.zeros_like(out_ref)

    x = logits_ref[...].astype(jnp.float32)      # (T, C); accepts bf16 inputs too
    lab = labels_ref[...]                        # (T, 1) int32
    t, c = x.shape

    valid_b = lab != -1                          # (T, 1) bool (CE ignore_index=-1)
    class_iota = lax.broadcasted_iota(jnp.int32, (t, c), 1)
    onehot_b = class_iota == lab                 # (T, C) bool (reused for CE and DCE)
    # TODO(synk): PyTorch F.one_hot raises on label == -1; here it yields an
    # all-zero row, so -1 rows still enter the DCE mean over all rows.

    # --- log-softmax pieces ---
    m = jnp.max(x, axis=-1, keepdims=True)       # (T, 1)
    e = jnp.exp(x - m)                           # (T, C)
    s = jnp.sum(e, axis=-1, keepdims=True)       # (T, 1)
    lse = m + jnp.log(s)                         # (T, 1)

    # --- cross entropy contributions (nonzero only at the valid label lane) ---
    hit = jnp.logical_and(onehot_b, valid_b)     # (T, C)
    ce_elems = jnp.where(hit, lse - x, 0.0)      # (T, C)
    cnt_elems = hit.astype(jnp.float32)          # (T, C); sums to #valid rows

    # --- DCE contributions ---
    inv_s = pl.reciprocal(s, approx=True)        # EUP approx recip (separate slot)
    pred = jnp.clip(e * inv_s, 1e-7, 1.0)
    # clip(onehot, 1e-4, 1) * (1 - delta) folded into one select (no f32 onehot temp)
    mix = pred * delta + jnp.where(onehot_b, 1.0 - delta, (1.0 - delta) * 1e-4)
    dce_elems = -pred * jnp.log(mix)             # (T, C)

    # Fold rows into the fixed 8-sublane accumulator: pure vreg-wise VPU adds
    # (the (T,C) -> (T//8, 8, C) reshape is a no-op regrouping of vregs).
    k = t // 8

    def fold(v):                                 # (T, C) -> (8, C)
        return jnp.sum(v.reshape(k, 8, c), axis=0)

    out_ref[0, 0, :, :] += fold(ce_elems)
    out_ref[0, 1, :, :] += fold(cnt_elems)
    out_ref[0, 2, :, :] += fold(dce_elems)


def _pick_tile(rows, cap_rows):
    """Largest multiple of 8 that divides `rows` and is <= cap_rows."""
    cap = min(rows, cap_rows)
    cap -= cap % 8
    cap = max(cap, 8)
    for t in range(cap, 7, -8):
        if rows % t == 0:
            return t
    return 8


def in_trust_loss(logits, labels, num_classes, alpha=1.0, beta=0.8, delta=0.5,
                  tile_n=None, num_splits=2,
                  vmem_limit_bytes=48 * 1024 * 1024):
    n, c = logits.shape
    assert c == num_classes
    assert n % 8 == 0, "row count must be a multiple of 8 (sublane width)"

    # Per-core split (v7x has 2 TensorCores); fall back to 1 if rows don't split.
    if num_splits < 1 or n % (num_splits * 8) != 0:
        num_splits = 1
    rows_per_split = n // num_splits

    # Large row tiles amortize per-step overhead; cap the logits block at a few
    # MiB so the double-buffered input stays well inside v7x's 64 MiB VMEM even
    # for vocab-scale C.
    if tile_n is None:
        itemsize = jnp.dtype(logits.dtype).itemsize
        cap_by_vmem = max(8, (4 * 1024 * 1024) // (c * itemsize))
        tile_n = _pick_tile(rows_per_split, min(1024, cap_by_vmem))
    assert rows_per_split % tile_n == 0 and tile_n % 8 == 0
    steps_per_split = rows_per_split // tile_n

    labels2d = labels.reshape(n, 1).astype(jnp.int32)
    kernel = functools.partial(_in_trust_kernel, delta=float(delta))

    acc = pl.pallas_call(
        kernel,
        out_shape=jax.ShapeDtypeStruct((num_splits, 3, 8, c), jnp.float32),
        grid=(num_splits, steps_per_split),
        in_specs=[
            pl.BlockSpec((tile_n, c), lambda s, i: (s * steps_per_split + i, 0)),
            pl.BlockSpec((tile_n, 1), lambda s, i: (s * steps_per_split + i, 0)),
        ],
        # Per-split accumulator block: resident across the inner ("arbitrary")
        # axis, distinct per parallel split -> no cross-core races.
        out_specs=pl.BlockSpec((1, 3, 8, c), lambda s, i: (s, 0, 0, 0)),
        compiler_params=pltpu.CompilerParams(
            dimension_semantics=("parallel", "arbitrary"),
            vmem_limit_bytes=vmem_limit_bytes),
    )(logits, labels2d)

    sums = jnp.sum(acc, axis=(0, 2, 3))          # (3,) tiny epilogue reduce
    ce_sum, n_valid, dce_sum = sums[0], sums[1], sums[2]
    ce = jnp.where(n_valid > 0, ce_sum / jnp.maximum(n_valid, 1.0), 0.0)
    dce_mean = dce_sum / n                       # mean over all rows (matches module)
    return alpha * ce + beta * dce_mean


def _reference(logits, labels, num_classes, alpha=1.0, beta=0.8, delta=0.5):
    logits = logits.astype(jnp.float32)
    logp = jax.nn.log_softmax(logits, axis=-1)
    valid = (labels != -1)
    safe_lab = jnp.where(valid, labels, 0)
    ce_rows = -jnp.take_along_axis(logp, safe_lab[:, None], axis=-1)[:, 0]
    ce = jnp.sum(jnp.where(valid, ce_rows, 0.0)) / jnp.sum(valid)
    pred = jnp.clip(jax.nn.softmax(logits, axis=-1), 1e-7, 1.0)
    oh = jnp.clip(jax.nn.one_hot(labels, num_classes, dtype=jnp.float32), 1e-4, 1.0)
    dce = -jnp.sum(pred * jnp.log(pred * delta + oh * (1.0 - delta)), axis=-1)
    return alpha * ce + beta * jnp.mean(dce)


if __name__ == "__main__":
    NUM_CLASSES = 16
    N = 64  # flattened batch of rows (e.g. batch * seq)

    key = jax.random.PRNGKey(0)
    k1, k2 = jax.random.split(key)
    logits = jax.random.normal(k1, (N, NUM_CLASSES), dtype=jnp.float32)
    labels = jax.random.randint(k2, (N,), 0, NUM_CLASSES, dtype=jnp.int32)

    loss = in_trust_loss(logits, labels, NUM_CLASSES,
                         alpha=1.0, beta=0.8, delta=0.5)
    loss = jax.block_until_ready(loss)

    ref = _reference(logits, labels, NUM_CLASSES, alpha=1.0, beta=0.8, delta=0.5)
    # Slightly loose rtol to accommodate the approx EUP reciprocal in the softmax.
    assert jnp.allclose(loss, ref, rtol=2e-3, atol=2e-4), (loss, ref)

    print("KERNEL_OK")
</pallas_src>

<mosaic_0001>
module attributes {stable_mosaic.version = 11 : i64} {
  func.func @_in_trust_kernel(%arg0: i32, %arg1: i32, %arg2: memref<32x16xf32, #tpu.memory_space<vmem>>, %arg3: memref<32x1xi32, #tpu.memory_space<vmem>>, %arg4: memref<1x3x8x16xf32, #tpu.memory_space<vmem>>) attributes {dimension_semantics = [#tpu.dimension_semantics<parallel>, #tpu.dimension_semantics<arbitrary>], iteration_bounds = array<i64: 2, 1>, scalar_prefetch = 0 : i64, scratch_operands = 0 : i64, tpu.core_type = #tpu.core_type<tc>, window_params = [{transform_indices = @transform_0, window_bounds = array<i64: 32, 16>}, {transform_indices = @transform_1, window_bounds = array<i64: 32, 1>}, {transform_indices = @transform_2, window_bounds = array<i64: 1, 3, 8, 16>}]} {
    %c0_i32 = arith.constant 0 : i32
    %0 = arith.cmpi eq, %arg1, %c0_i32 : i32
    %1 = arith.extui %0 : i1 to i32
    %c0_i32_0 = arith.constant 0 : i32
    %2 = arith.cmpi ne, %1, %c0_i32_0 : i32
    scf.if %2 {
      %cst_37 = arith.constant 0.000000e+00 : f32
      %68 = vector.broadcast %cst_37 : f32 to vector<1x3x8x16xf32>
      %c0_38 = arith.constant 0 : index
      %c0_39 = arith.constant 0 : index
      %c0_40 = arith.constant 0 : index
      %c0_41 = arith.constant 0 : index
      %69 = vector.load %arg4[%c0_38, %c0_39, %c0_40, %c0_41] : memref<1x3x8x16xf32, #tpu.memory_space<vmem>>, vector<1x3x8x16xf32>
      tpu.vector_store %arg4[%c0_38, %c0_39, %c0_40, %c0_41], %68 {strides = array<i32>} : memref<1x3x8x16xf32, #tpu.memory_space<vmem>>, vector<1x3x8x16xf32>,
    } else {
    }
    %c0 = arith.constant 0 : index
    %c0_1 = arith.constant 0 : index
    %3 = vector.load %arg2[%c0, %c0_1] : memref<32x16xf32, #tpu.memory_space<vmem>>, vector<32x16xf32>
    %c0_2 = arith.constant 0 : index
    %c0_3 = arith.constant 0 : index
    %4 = vector.load %arg3[%c0_2, %c0_3] : memref<32x1xi32, #tpu.memory_space<vmem>>, vector<32x1xi32>
    %c-1_i32 = arith.constant -1 : i32
    %5 = vector.broadcast %c-1_i32 : i32 to vector<32x1xi32>
    %6 = arith.cmpi ne, %4, %5 : vector<32x1xi32>
    %7 = tpu.iota {dimensions = array<i32: 1>} : vector<32x16xi32>
    %8 = vector.broadcast %4 : vector<32x1xi32> to vector<32x16xi32>
    %9 = arith.cmpi eq, %7, %8 : vector<32x16xi32>
    %cst = arith.constant dense<0xFF800000> : vector<32xf32>
    %10 = vector.multi_reduction <maximumf>, %3, %cst [1] : vector<32x16xf32> to vector<32xf32>
    %11 = vector.shape_cast %10 : vector<32xf32> to vector<32x1xf32>
    %12 = vector.broadcast %11 : vector<32x1xf32> to vector<32x16xf32>
    %13 = arith.subf %3, %12 : vector<32x16xf32>
    %14 = math.exp %13 : vector<32x16xf32>
    %cst_4 = arith.constant dense<0.000000e+00> : vector<32xf32>
    %15 = vector.multi_reduction <add>, %14, %cst_4 [1] : vector<32x16xf32> to vector<32xf32>
    %16 = vector.shape_cast %15 : vector<32xf32> to vector<32x1xf32>
    %17 = math.log %16 : vector<32x1xf32>
    %18 = arith.addf %11, %17 : vector<32x1xf32>
    %19 = vector.broadcast %6 : vector<32x1xi1> to vector<32x16xi1>
    %20 = arith.andi %9, %19 : vector<32x16xi1>
    %21 = vector.broadcast %18 : vector<32x1xf32> to vector<32x16xf32>
    %22 = arith.subf %21, %3 : vector<32x16xf32>
    %cst_5 = arith.constant 0.000000e+00 : f32
    %23 = vector.broadcast %cst_5 : f32 to vector<32x16xf32>
    %24 = arith.select %20, %22, %23 : vector<32x16xi1>, vector<32x16xf32>
    %25 = arith.extui %20 : vector<32x16xi1> to vector<32x16xi32>
    %26 = arith.sitofp %25 : vector<32x16xi32> to vector<32x16xf32>
    %27 = tpu.reciprocal %16 {approx = true} : vector<32x1xf32> -> vector<32x1xf32>
    %28 = vector.broadcast %27 : vector<32x1xf32> to vector<32x16xf32>
    %29 = arith.mulf %14, %28 : vector<32x16xf32>
    %cst_6 = arith.constant 1.000000e-07 : f32
    %cst_7 = arith.constant 1.000000e+00 : f32
    %30 = vector.broadcast %cst_6 : f32 to vector<32x16xf32>
    %31 = arith.maximumf %30, %29 : vector<32x16xf32>
    %32 = vector.broadcast %cst_7 : f32 to vector<32x16xf32>
    %33 = arith.minimumf %32, %31 : vector<32x16xf32>
    %cst_8 = arith.constant 5.000000e-01 : f32
    %34 = vector.broadcast %cst_8 : f32 to vector<32x16xf32>
    %35 = arith.mulf %33, %34 : vector<32x16xf32>
    %cst_9 = arith.constant 5.000000e-01 : f32
    %cst_10 = arith.constant 5.000000e-05 : f32
    %36 = vector.broadcast %cst_9 : f32 to vector<32x16xf32>
    %37 = vector.broadcast %cst_10 : f32 to vector<32x16xf32>
    %38 = arith.select %9, %36, %37 : vector<32x16xi1>, vector<32x16xf32>
    %39 = arith.addf %35, %38 : vector<32x16xf32>
    %cst_11 = arith.constant 0.000000e+00 : f32
    %40 = vector.broadcast %cst_11 : f32 to vector<32x16xf32>
    %41 = arith.subf %40, %33 : vector<32x16xf32>
    %42 = math.log %39 : vector<32x16xf32>
    %43 = arith.mulf %41, %42 : vector<32x16xf32>
    %c0_12 = arith.constant 0 : index
    %c0_13 = arith.constant 0 : index
    %c0_14 = arith.constant 0 : index
    %c0_15 = arith.constant 0 : index
    %44 = vector.load %arg4[%c0_12, %c0_13, %c0_14, %c0_15] : memref<1x3x8x16xf32, #tpu.memory_space<vmem>>, vector<1x1x8x16xf32>
    %45 = vector.shape_cast %44 : vector<1x1x8x16xf32> to vector<8x16xf32>
    %46 = vector.shape_cast %24 : vector<32x16xf32> to vector<4x8x16xf32>
    %cst_16 = arith.constant dense<0.000000e+00> : vector<8x16xf32>
    %47 = vector.multi_reduction <add>, %46, %cst_16 [0] : vector<4x8x16xf32> to vector<8x16xf32>
    %48 = arith.addf %45, %47 : vector<8x16xf32>
    %c0_17 = arith.constant 0 : index
    %c0_18 = arith.constant 0 : index
    %c0_19 = arith.constant 0 : index
    %c0_20 = arith.constant 0 : index
    %49 = vector.load %arg4[%c0_17, %c0_18, %c0_19, %c0_20] : memref<1x3x8x16xf32, #tpu.memory_space<vmem>>, vector<1x1x8x16xf32>
    %50 = vector.shape_cast %49 : vector<1x1x8x16xf32> to vector<8x16xf32>
    %51 = vector.shape_cast %48 : vector<8x16xf32> to vector<1x1x8x16xf32>
    tpu.vector_store %arg4[%c0_17, %c0_18, %c0_19, %c0_20], %51 {strides = array<i32>} : memref<1x3x8x16xf32, #tpu.memory_space<vmem>>, vector<1x1x8x16xf32>,
    %c0_21 = arith.constant 0 : index
    %c1 = arith.constant 1 : index
    %c0_22 = arith.constant 0 : index
    %c0_23 = arith.constant 0 : index
    %52 = vector.load %arg4[%c0_21, %c1, %c0_22, %c0_23] : memref<1x3x8x16xf32, #tpu.memory_space<vmem>>, vector<1x1x8x16xf32>
    %53 = vector.shape_cast %52 : vector<1x1x8x16xf32> to vector<8x16xf32>
    %54 = vector.shape_cast %26 : vector<32x16xf32> to vector<4x8x16xf32>
    %cst_24 = arith.constant dense<0.000000e+00> : vector<8x16xf32>
    %55 = vector.multi_reduction <add>, %54, %cst_24 [0] : vector<4x8x16xf32> to vector<8x16xf32>
    %56 = arith.addf %53, %55 : vector<8x16xf32>
    %c0_25 = arith.constant 0 : index
    %c1_26 = arith.constant 1 : index
    %c0_27 = arith.constant 0 : index
    %c0_28 = arith.constant 0 : index
    %57 = vector.load %arg4[%c0_25, %c1_26, %c0_27, %c0_28] : memref<1x3x8x16xf32, #tpu.memory_space<vmem>>, vector<1x1x8x16xf32>
    %58 = vector.shape_cast %57 : vector<1x1x8x16xf32> to vector<8x16xf32>
    %59 = vector.shape_cast %56 : vector<8x16xf32> to vector<1x1x8x16xf32>
    tpu.vector_store %arg4[%c0_25, %c1_26, %c0_27, %c0_28], %59 {strides = array<i32>} : memref<1x3x8x16xf32, #tpu.memory_space<vmem>>, vector<1x1x8x16xf32>,
    %c0_29 = arith.constant 0 : index
    %c2 = arith.constant 2 : index
    %c0_30 = arith.constant 0 : index
    %c0_31 = arith.constant 0 : index
    %60 = vector.load %arg4[%c0_29, %c2, %c0_30, %c0_31] : memref<1x3x8x16xf32, #tpu.memory_space<vmem>>, vector<1x1x8x16xf32>
    %61 = vector.shape_cast %60 : vector<1x1x8x16xf32> to vector<8x16xf32>
    %62 = vector.shape_cast %43 : vector<32x16xf32> to vector<4x8x16xf32>
    %cst_32 = arith.constant dense<0.000000e+00> : vector<8x16xf32>
    %63 = vector.multi_reduction <add>, %62, %cst_32 [0] : vector<4x8x16xf32> to vector<8x16xf32>
    %64 = arith.addf %61, %63 : vector<8x16xf32>
    %c0_33 = arith.constant 0 : index
    %c2_34 = arith.constant 2 : index
    %c0_35 = arith.constant 0 : index
    %c0_36 = arith.constant 0 : index
    %65 = vector.load %arg4[%c0_33, %c2_34, %c0_35, %c0_36] : memref<1x3x8x16xf32, #tpu.memory_space<vmem>>, vector<1x1x8x16xf32>
    %66 = vector.shape_cast %65 : vector<1x1x8x16xf32> to vector<8x16xf32>
    %67 = vector.shape_cast %64 : vector<8x16xf32> to vector<1x1x8x16xf32>
    tpu.vector_store %arg4[%c0_33, %c2_34, %c0_35, %c0_36], %67 {strides = array<i32>} : memref<1x3x8x16xf32, #tpu.memory_space<vmem>>, vector<1x1x8x16xf32>,
    return
  }
  func.func @transform_0(%arg0: i32, %arg1: i32) -> (i32, i32) {
    %c1_i32 = arith.constant 1 : i32
    %0 = arith.muli %arg0, %c1_i32 : i32
    %1 = arith.addi %0, %arg1 : i32
    %c0_i32 = arith.constant 0 : i32
    %c0_i32_0 = arith.constant 0 : i32
    return %1, %c0_i32 : i32, i32
  }
  func.func @transform_1(%arg0: i32, %arg1: i32) -> (i32, i32) {
    %c1_i32 = arith.constant 1 : i32
    %0 = arith.muli %arg0, %c1_i32 : i32
    %1 = arith.addi %0, %arg1 : i32
    %c0_i32 = arith.constant 0 : i32
    %c0_i32_0 = arith.constant 0 : i32
    return %1, %c0_i32 : i32, i32
  }
  func.func @transform_2(%arg0: i32, %arg1: i32) -> (i32, i32, i32, i32) {
    %c0_i32 = arith.constant 0 : i32
    %c0_i32_0 = arith.constant 0 : i32
    %c0_i32_1 = arith.constant 0 : i32
    %c0_i32_2 = arith.constant 0 : i32
    return %arg0, %c0_i32, %c0_i32_0, %c0_i32_1 : i32, i32, i32, i32
  }
}

</mosaic_0001>

<llo_original>
// kernel: tpu_custom_call.1
$region0: #{tpu_custom_call.1}
  #allocation0 [shape = 'u32[]', space=smem, size = 0x4, offset = 0x4, fixed_abs, tag = 'smem constant byte address 0x4 - core index']
  #allocation1 [shape = 'u32[144,128]{1,0:T(1,128)}', space=vmem, size = 0x12000, scoped, tag = 'internal scratch']
  %s0 = inlined_call_operand.vmem [shape: f32[64,16], index: 0, kind: input, shape index: {}]
  %s1 = inlined_call_operand.vmem [shape: s32[64,1], index: 1, kind: input, shape index: {}]
  %s2 = inlined_call_operand.hbm [shape: f32[2,3,8,16], index: 2, kind: output, shape index: {}]
  %s3 = sld [smem:[#allocation0]]
  $region45: #{tpu_custom_call.1} parent=0
    _
  %s5 = ssub.s32 1, %s3
  %s6 = scalar_select 0, %s5, %s3
  $region1: #{tpu_custom_call.1} parent=0
    #allocation2 [shape = 'u8[24576]{0}', space=vmem, size = 0x6000, scoped, tag = 'output window, operand 0']
    #allocation3 [shape = 's32[2]{0}', space=sflag, size = 0x8, scoped, tag = 'scoped memory for tpu_custom_call.1']
    %7 = vsyncpa [#allocation3], 0
    %s8 = scalar_lea.sflag [#allocation3], 1
    %9 = vsyncpa %s8, 0
    loop: start=0, step=1, limit=4
    $region2: #{tpu_custom_call.1} parent=1 // loop_pre_header
      _
    $region3: #{tpu_custom_call.1} parent=1 // loop_header
      %s11 = sphi 0, %s15
      %p12 = scmp.ge.s32.totalorder %s11, 4
      %s18 = sphi 0, %s30
      %s19 = sphi 0, %s26
      %s20 = sphi 0, %s18
      %s21 = sphi 0, %s19
      %s22 = sphi 0, %s20
      %s23 = sphi 0, %s21
      %s35 = sphi 0, %s37
      %s38 = sphi 0, %s35
      %s39 = sphi 0, %s38
      %s55 = sphi 0, %s39
      %s63 = sphi 0, %s65
      %s66 = sphi 0, %s63
      %s67 = sphi 0, %s66
      %s83 = sphi 0, %s67
      %s89 = sphi 0, %s91
      %s92 = sphi 0, %s89
      %s93 = sphi 0, %s92
      %s109 = sphi 0, %s93
    $region4: #{tpu_custom_call.1} parent=1 // loop_header_branch
      %14 = sbr.rel (%p12) target = $region8
    $region5: #{tpu_custom_call.1} parent=1 // loop_body
      %s16 = ssub.s32 %s11, 1
      %s17 = ssub.s32 %s11, 2
      %s24 = sadd.s32 1, %s19
      %p25 = scmp.ge.s32.totalorder %s24, 1
      %s26 = scalar_select %p25, 0, %s24
      %s27 = sadd.s32 1, %s18
      %s28 = scalar_select %p25, %s27, %s18
      %p29 = scmp.ge.s32.totalorder %s28, 2
      %s30 = scalar_select %p29, 0, %s28
      %s31 = sadd.s32 %s18, %s19
      %s32 = sadd.s32 %s30, %s26
      %s33 = ssub.s32 %s31, %s32
      %p34 = scmp.eq.s32.totalorder %s33, 0
      %s36 = sadd.s32 %s35, 1
      %s37 = scalar_select %p34, %s35, %s36
      %p40 = pneg %p34
      %p41 = scmp.eq.s32.totalorder %s11, 1
      %p42 = por %p40, %p41
      %p43 = scmp.ne.s32.totalorder %s35, %s38
      %p44 = scmp.eq.s32.totalorder %s11, 0
      %p45 = por %p43, %p44
      %p46 = scmp.ne.s32.totalorder %s35, %s38
      %p47 = scmp.eq.s32.totalorder %s16, 1
      %p48 = por %p46, %p47
      %p49 = scmp.ne.s32.totalorder %s38, %s39
      %p50 = scmp.eq.s32.totalorder %s16, 0
      %p51 = por %p49, %p50
      %p52 = scmp.ne.s32.totalorder %s38, %s39
      %p53 = scmp.eq.s32.totalorder %s17, 1
      %p54 = por %p52, %p53
      %p56 = scmp.ne.s32.totalorder %s39, %s55
      %p57 = scmp.eq.s32.totalorder %s17, 0
      %p58 = por %p56, %p57
      %s59 = sadd.s32 %s18, %s19
      %s60 = sadd.s32 %s30, %s26
      %s61 = ssub.s32 %s59, %s60
      %p62 = scmp.eq.s32.totalorder %s61, 0
      %s64 = sadd.s32 %s63, 1
      %s65 = scalar_select %p62, %s63, %s64
      %p68 = pneg %p62
      %p69 = scmp.eq.s32.totalorder %s11, 1
      %p70 = por %p68, %p69
      %p71 = scmp.ne.s32.totalorder %s63, %s66
      %p72 = scmp.eq.s32.totalorder %s11, 0
      %p73 = por %p71, %p72
      %p74 = scmp.ne.s32.totalorder %s63, %s66
      %p75 = scmp.eq.s32.totalorder %s16, 1
      %p76 = por %p74, %p75
      %p77 = scmp.ne.s32.totalorder %s66, %s67
      %p78 = scmp.eq.s32.totalorder %s16, 0
      %p79 = por %p77, %p78
      %p80 = scmp.ne.s32.totalorder %s66, %s67
      %p81 = scmp.eq.s32.totalorder %s17, 1
      %p82 = por %p80, %p81
      %p84 = scmp.ne.s32.totalorder %s67, %s83
      %p85 = scmp.eq.s32.totalorder %s17, 0
      %p86 = por %p84, %p85
      %s87 = ssub.s32 %s18, %s30
      %p88 = scmp.eq.s32.totalorder %s87, 0
      %s90 = sadd.s32 %s89, 1
      %s91 = scalar_select %p88, %s89, %s90
      %p94 = pneg %p88
      %p95 = scmp.eq.s32.totalorder %s11, 1
      %p96 = por %p94, %p95
      %p97 = scmp.ne.s32.totalorder %s89, %s92
      %p98 = scmp.eq.s32.totalorder %s11, 0
      %p99 = por %p97, %p98
      %p100 = scmp.ne.s32.totalorder %s89, %s92
      %p101 = scmp.eq.s32.totalorder %s16, 1
      %p102 = por %p100, %p101
      %p103 = scmp.ne.s32.totalorder %s92, %s93
      %p104 = scmp.eq.s32.totalorder %s16, 0
      %p105 = por %p103, %p104
      %p106 = scmp.ne.s32.totalorder %s92, %s93
      %p107 = scmp.eq.s32.totalorder %s17, 1
      %p108 = por %p106, %p107
      %p110 = scmp.ne.s32.totalorder %s93, %s109
      %p111 = scmp.eq.s32.totalorder %s17, 0
      %p112 = por %p110, %p111
      %p113 = scmp.le.s32.totalorder 1, %s11
      %p114 = scmp.lt.s32.totalorder %s11, 3
      %p115 = pnand %p113, %p114
      %p116 = pneg %p115
      // Predicated region
      $region9: #{tpu_custom_call.1} parent=5 // pred_check
        _
      $region10: #{tpu_custom_call.1} parent=5 // pred_check_branch
        %118 = sbr.rel (%p115) target = $region12
      $region11: #{tpu_custom_call.1} parent=5 // pred_region
        %s119 = ssub.s32 %s11, 1
      $region12: #{tpu_custom_call.1} parent=5 // pred_fallthru
        _
      %p120 = scmp.lt.s32.totalorder %s11, 2
      // Predicated region
      $region13: #{tpu_custom_call.1} parent=5 // pred_check
        %p121 = pneg %p120
      $region14: #{tpu_custom_call.1} parent=5 // pred_check_branch
        %123 = sbr.rel (%p121) target = $region16
      $region15: #{tpu_custom_call.1} parent=5 // pred_region
        // Predicated region
        $region17: #{tpu_custom_call.1} parent=15 // pred_check
          %p124 = pneg %p45
        $region18: #{tpu_custom_call.1} parent=15 // pred_check_branch
          %126 = sbr.rel (%p124) target = $region20
        $region19: #{tpu_custom_call.1} parent=15 // pred_region
          %s127 = sadd.s32 %s18, %s19
          %s128 = smul.u32 4, %s127
          %p129 = scmp.lt.s32.totalorder %s128, 7
          %s130 = scalar_select %p129, %s128, 7
          %s131 = smul.addr %s130, 8
          %s132 = scalar_lea.vmem %s0, %s131
          %s133 = sadd.s32 %s18, %s19
          %s134 = smul.u32 4, %s133
        $region20: #{tpu_custom_call.1} parent=15 // pred_fallthru
          _
        // Predicated region
        $region21: #{tpu_custom_call.1} parent=15 // pred_check
          %p135 = pneg %p73
        $region22: #{tpu_custom_call.1} parent=15 // pred_check_branch
          %137 = sbr.rel (%p135) target = $region24
        $region23: #{tpu_custom_call.1} parent=15 // pred_region
          %s138 = sadd.s32 %s18, %s19
          %s139 = smul.u32 4, %s138
          %p140 = scmp.lt.s32.totalorder %s139, 7
          %s141 = scalar_select %p140, %s139, 7
          %s142 = smul.addr %s141, 8
          %s143 = scalar_lea.vmem %s1, %s142
          %s144 = sadd.s32 %s18, %s19
          %s145 = smul.u32 4, %s144
        $region24: #{tpu_custom_call.1} parent=15 // pred_fallthru
          _
      $region16: #{tpu_custom_call.1} parent=5 // pred_fallthru
        _
      %p146 = scmp.le.s32.totalorder 1, %s11
      %p147 = scmp.lt.s32.totalorder %s11, 3
      %p148 = pnand %p146, %p147
      %p149 = pneg %p148
      // Predicated region
      $region25: #{tpu_custom_call.1} parent=5 // pred_check
        _
      $region26: #{tpu_custom_call.1} parent=5 // pred_check_branch
        %151 = sbr.rel (%p148) target = $region28
      $region27: #{tpu_custom_call.1} parent=5 // pred_region
        %s152 = ssub.s32 %s11, 1
        %s153 = sadd.s32 %s20, %s21
        %s154 = smul.u32 4, %s153
        %p155 = scmp.lt.s32.totalorder %s154, 7
        %s156 = scalar_select %p155, %s154, 7
        %s157 = smul.addr %s156, 8
        %s158 = scalar_lea.vmem %s0, %s157
        %p159 = pneg %p51
        %p160 = pneg %p48
        %s161 = sadd.s32 %s20, %s21
        %s162 = smul.u32 4, %s161
        %p163 = scmp.lt.s32.totalorder %s162, 7
        %s164 = scalar_select %p163, %s162, 7
        %s165 = smul.addr %s164, 8
        %s166 = scalar_lea.vmem %s1, %s165
        %p167 = pneg %p79
        %p168 = pneg %p76
        %p169 = pneg %p105
        %p170 = pneg %p102
        %s171 = sand.u32 %s92, 1
        %s172 = scalar_lea.sflag [#allocation3], %s171
        %s173 = sand.u32 %s92, 1
        %s174 = smul.addr %s173, 24
        %s175 = scalar_lea.vmem [#allocation2], %s174
        %s176 = sadd.s32 %s20, %s21
        %s177 = smul.u32 4, %s176
        %p178 = scmp.lt.s32.totalorder %s177, 7
        %s179 = scalar_select %p178, %s177, 7
        %s180 = smul.addr %s179, 8
        %s181 = scalar_lea.vmem %s0, %s180
        %s182 = sadd.s32 %s20, %s21
        %s183 = smul.u32 4, %s182
        %s184 = sadd.s32 %s20, %s21
        %s185 = smul.u32 4, %s184
        %p186 = scmp.lt.s32.totalorder %s185, 7
        %s187 = scalar_select %p186, %s185, 7
        %s188 = smul.addr %s187, 8
        %s189 = scalar_lea.vmem %s1, %s188
        %s190 = sadd.s32 %s20, %s21
        %s191 = smul.u32 4, %s190
        %p192 = scmp.eq.s32.totalorder %s21, 0
        // Predicated region
        $region29: #{tpu_custom_call.1} parent=27 // pred_check
          %p193 = pneg %p192
        $region30: #{tpu_custom_call.1} parent=27 // pred_check_branch
          %195 = sbr.rel (%p193) target = $region32
        $region31: #{tpu_custom_call.1} parent=27 // pred_region
          %vm196 = vcmask 130048
          %197 = vst.msk [vmem:[%s175] sm:$0xff] %vm196, 0.0
          %198 = vst.msk [vmem:[%s175 + $0x8] sm:$0xff] %vm196, 0.0
          %199 = vst.msk [vmem:[%s175 + $0x10] sm:$0xff] %vm196, 0.0
        $region32: #{tpu_custom_call.1} parent=27 // pred_fallthru
          _
        %v200 = vld [vmem:[%s181] sm:$0xff]
        %v201 = vld [vmem:[%s181 + $0x8] sm:$0xff]
        %v202 = vld [vmem:[%s181 + $0x10] sm:$0xff]
        %v203 = vld [vmem:[%s181 + $0x18] sm:$0xff]
        %v204 = vld [vmem:[%s189] sm:$0xff]
        %v205 = vld [vmem:[%s189 + $0x8] sm:$0xff]
        %v206 = vld [vmem:[%s189 + $0x10] sm:$0xff]
        %v207 = vld [vmem:[%s189 + $0x18] sm:$0xff]
        %vm208 = vcmp.ne.s32.totalorder %v204, 4294967295
        %vm209 = vcmp.ne.s32.totalorder %v205, 4294967295
        %vm210 = vcmp.ne.s32.totalorder %v206, 4294967295
        %vm211 = vcmp.ne.s32.totalorder %v207, 4294967295
        %v212 = vlaneseq
        %v213 = vand.u32 %v212, 127
        %214 = vset.pattern.permute.xlu0 0
        %215 = vperm.xlu0 %214, %v204
        %v216 = vpop.permute.xlu0 %215
        %217 = vset.pattern.permute.xlu0 0
        %218 = vperm.xlu0 %217, %v205
        %v219 = vpop.permute.xlu0 %218
        %220 = vset.pattern.permute.xlu0 0
        %221 = vperm.xlu0 %220, %v206
        %v222 = vpop.permute.xlu0 %221
        %223 = vset.pattern.permute.xlu0 0
        %224 = vperm.xlu0 %223, %v207
        %v225 = vpop.permute.xlu0 %224
        %vm226 = vcmp.eq.s32.totalorder %v213, %v216
        %vm227 = vcmp.eq.s32.totalorder %v213, %v219
        %vm228 = vcmp.eq.s32.totalorder %v213, %v222
        %vm229 = vcmp.eq.s32.totalorder %v213, %v225
        %vm230 = vcmask 130048
        %v231 = vsel %vm230, %v200, -inf
        %232 = vmax.xlane.f32.xlu0 %v231
        %v233 = vpop.xlane.xlu0 %232
        %v234 = vsel %vm230, %v201, -inf
        %235 = vmax.xlane.f32.xlu0 %v234
        %v236 = vpop.xlane.xlu0 %235
        %v237 = vsel %vm230, %v202, -inf
        %238 = vmax.xlane.f32.xlu0 %v237
        %v239 = vpop.xlane.xlu0 %238
        %v240 = vsel %vm230, %v203, -inf
        %241 = vmax.xlane.f32.xlu0 %v240
        %v242 = vpop.xlane.xlu0 %241
        %v243 = vsub.f32 %v200, %v233
        %v244 = vsub.f32 %v201, %v236
        %v245 = vsub.f32 %v202, %v239
        %v246 = vsub.f32 %v203, %v242
        %v247 = vmul.f32 %v243, 1.442695
        %v248 = vpow.pop %v247
        %v249 = vmul.f32 %v244, 1.442695
        %v250 = vpow.pop %v249
        %v251 = vmul.f32 %v245, 1.442695
        %v252 = vpow.pop %v251
        %v253 = vmul.f32 %v246, 1.442695
        %v254 = vpow.pop %v253
        %v255 = vsel %vm230, %v248, 0.0
        %256 = vadd.xlane.f32.xlu0 %v255
        %v257 = vpop.xlane.xlu0 %256
        %v258 = vsel %vm230, %v250, 0.0
        %259 = vadd.xlane.f32.xlu0 %v258
        %v260 = vpop.xlane.xlu0 %259
        %v261 = vsel %vm230, %v252, 0.0
        %262 = vadd.xlane.f32.xlu0 %v261
        %v263 = vpop.xlane.xlu0 %262
        %v264 = vsel %vm230, %v254, 0.0
        %265 = vadd.xlane.f32.xlu0 %v264
        %v266 = vpop.xlane.xlu0 %265
        %v267 = vlog2.pop %v257
        %v268 = vmul.f32 %v267, 0.6931472
        %v269 = vlog2.pop %v260
        %v270 = vmul.f32 %v269, 0.6931472
        %v271 = vlog2.pop %v263
        %v272 = vmul.f32 %v271, 0.6931472
        %v273 = vlog2.pop %v266
        %v274 = vmul.f32 %v273, 0.6931472
        %v275 = vadd.f32 %v233, %v268
        %v276 = vadd.f32 %v236, %v270
        %v277 = vadd.f32 %v239, %v272
        %v278 = vadd.f32 %v242, %v274
        %v279 = vsel %vm208, 1, 0
        %v280 = vsel %vm209, 1, 0
        %v281 = vsel %vm210, 1, 0
        %v282 = vsel %vm211, 1, 0
        %283 = vset.pattern.permute.xlu0 0
        %284 = vperm.xlu0 %283, %v279
        %v285 = vpop.permute.xlu0 %284
        %286 = vset.pattern.permute.xlu0 0
        %287 = vperm.xlu0 %286, %v280
        %v288 = vpop.permute.xlu0 %287
        %289 = vset.pattern.permute.xlu0 0
        %290 = vperm.xlu0 %289, %v281
        %v291 = vpop.permute.xlu0 %290
        %292 = vset.pattern.permute.xlu0 0
        %293 = vperm.xlu0 %292, %v282
        %v294 = vpop.permute.xlu0 %293
        %vm295 = vcmp.eq.s32.totalorder %v285, 1
        %vm296 = vcmp.eq.s32.totalorder %v288, 1
        %vm297 = vcmp.eq.s32.totalorder %v291, 1
        %vm298 = vcmp.eq.s32.totalorder %v294, 1
        %vm299 = vmand %vm226, %vm295
        %vm300 = vmand %vm227, %vm296
        %vm301 = vmand %vm228, %vm297
        %vm302 = vmand %vm229, %vm298
        %v303 = vsub.f32 %v275, %v200
        %v304 = vsub.f32 %v276, %v201
        %v305 = vsub.f32 %v277, %v202
        %v306 = vsub.f32 %v278, %v203
        %v307 = vsel %vm299, %v303, 0.0
        %v308 = vsel %vm300, %v304, 0.0
        %v309 = vsel %vm301, %v305, 0.0
        %v310 = vsel %vm302, %v306, 0.0
        %v311 = vsel %vm299, 1, 0
        %v312 = vsel %vm300, 1, 0
        %v313 = vsel %vm301, 1, 0
        %v314 = vsel %vm302, 1, 0
        %v315 = vcvt.s32.f32 %v311
        %v316 = vcvt.s32.f32 %v312
        %v317 = vcvt.s32.f32 %v313
        %v318 = vcvt.s32.f32 %v314
        %v319 = vrcp.pop %v257
        %v320 = vrcp.pop %v260
        %v321 = vrcp.pop %v263
        %v322 = vrcp.pop %v266
        %v323 = vmul.f32 %v248, %v319
        %v324 = vmul.f32 %v250, %v320
        %v325 = vmul.f32 %v252, %v321
        %v326 = vmul.f32 %v254, %v322
        %v327 = vmax.f32 %v323, 1e-07
        %v328 = vmax.f32 %v324, 1e-07
        %v329 = vmax.f32 %v325, 1e-07
        %v330 = vmax.f32 %v326, 1e-07
        %v331 = vmin.f32 %v327, 1.0
        %v332 = vmin.f32 %v328, 1.0
        %v333 = vmin.f32 %v329, 1.0
        %v334 = vmin.f32 %v330, 1.0
        %v335 = vmul.f32 %v331, 0.5
        %v336 = vmul.f32 %v332, 0.5
        %v337 = vmul.f32 %v333, 0.5
        %v338 = vmul.f32 %v334, 0.5
        %v339 = vsel %vm226, 0.5, 5e-05
        %v340 = vsel %vm227, 0.5, 5e-05
        %v341 = vsel %vm228, 0.5, 5e-05
        %v342 = vsel %vm229, 0.5, 5e-05
        %v343 = vadd.f32 %v335, %v339
        %v344 = vadd.f32 %v336, %v340
        %v345 = vadd.f32 %v337, %v341
        %v346 = vadd.f32 %v338, %v342
        %v347 = vsub.f32 0.0, %v331
        %v348 = vsub.f32 0.0, %v332
        %v349 = vsub.f32 0.0, %v333
        %v350 = vsub.f32 0.0, %v334
        %v351 = vlog2.pop %v343
        %v352 = vmul.f32 %v351, 0.6931472
        %v353 = vlog2.pop %v344
        %v354 = vmul.f32 %v353, 0.6931472
        %v355 = vlog2.pop %v345
        %v356 = vmul.f32 %v355, 0.6931472
        %v357 = vlog2.pop %v346
        %v358 = vmul.f32 %v357, 0.6931472
        %v359 = vmul.f32 %v347, %v352
        %v360 = vmul.f32 %v348, %v354
        %v361 = vmul.f32 %v349, %v356
        %v362 = vmul.f32 %v350, %v358
        %v363 = vld [vmem:[%s175] sm:$0xff]
        %v364 = vsel %vm230, %v307, 0.0
        %v365 = vsel %vm230, %v308, 0.0
        %v366 = vadd.f32 %v364, %v365
        %v367 = vsel %vm230, %v309, 0.0
        %v368 = vadd.f32 %v366, %v367
        %v369 = vsel %vm230, %v310, 0.0
        %v370 = vadd.f32 %v368, %v369
        %v371 = vadd.f32 %v363, %v370
        %372 = vst.msk [vmem:[%s175] sm:$0xff] %vm230, %v371
        %s373 = scalar_lea.vmem %s175, 8 [#allocation2]
        %v374 = vld [vmem:[%s373] sm:$0xff]
        %v375 = vsel %vm230, %v315, 0.0
        %v376 = vsel %vm230, %v316, 0.0
        %v377 = vadd.f32 %v375, %v376
        %v378 = vsel %vm230, %v317, 0.0
        %v379 = vadd.f32 %v377, %v378
        %v380 = vsel %vm230, %v318, 0.0
        %v381 = vadd.f32 %v379, %v380
        %v382 = vadd.f32 %v374, %v381
        %383 = vst.msk [vmem:[%s373] sm:$0xff] %vm230, %v382
        %s384 = scalar_lea.vmem %s175, 16 [#allocation2]
        %v385 = vld [vmem:[%s384] sm:$0xff]
        %v386 = vsel %vm230, %v359, 0.0
        %v387 = vsel %vm230, %v360, 0.0
        %v388 = vadd.f32 %v386, %v387
        %v389 = vsel %vm230, %v361, 0.0
        %v390 = vadd.f32 %v388, %v389
        %v391 = vsel %vm230, %v362, 0.0
        %v392 = vadd.f32 %v390, %v391
        %v393 = vadd.f32 %v385, %v392
        %394 = vst.msk [vmem:[%s384] sm:$0xff] %vm230, %v393
        %s395 = sand.u32 %s92, 1
        %s396 = scalar_lea.sflag [#allocation3], %s395
        %s397 = sand.u32 %s92, 1
        %s398 = smul.addr %s397, 24
        %s399 = scalar_lea.vmem [#allocation2], %s398
        // Predicated region
        $region33: #{tpu_custom_call.1} parent=27 // pred_check
          %p400 = pneg %p102
        $region34: #{tpu_custom_call.1} parent=27 // pred_check_branch
          %402 = sbr.rel (%p400) target = $region36
        $region35: #{tpu_custom_call.1} parent=27 // pred_region
          %s404 = ssub.s32 384, 384
          %405 = vsyncadd %s396, %s404
          %s406 = smul.addr %s20, 3
          %s407 = smul.addr %s406, 128
          %s408 = scalar_lea.hbm %s2, %s407
          %s409 = sshll.u32 %s399, 4
          %s410 = int_to_ptr.vmem [resolvable:$true] %s409
          %415 = dma.vmem_to_hbm [thread:$0]  %s410, 384, %s408, %s396, 128, 128, 8
        $region36: #{tpu_custom_call.1} parent=27 // pred_fallthru
          _
      $region28: #{tpu_custom_call.1} parent=5 // pred_fallthru
        _
      %p416 = scmp.le.s32.totalorder 2, %s11
      // Predicated region
      $region37: #{tpu_custom_call.1} parent=5 // pred_check
        %p417 = pneg %p416
      $region38: #{tpu_custom_call.1} parent=5 // pred_check_branch
        %419 = sbr.rel (%p417) target = $region40
      $region39: #{tpu_custom_call.1} parent=5 // pred_region
        %s420 = ssub.s32 %s11, 2
        // Predicated region
        $region41: #{tpu_custom_call.1} parent=39 // pred_check
          %p421 = pneg %p108
        $region42: #{tpu_custom_call.1} parent=39 // pred_check_branch
          %423 = sbr.rel (%p421) target = $region44
        $region43: #{tpu_custom_call.1} parent=39 // pred_region
          %s424 = sand.u32 %s93, 1
          %s425 = scalar_lea.sflag [#allocation3], %s424
          %s426 = sand.u32 %s93, 1
          %s427 = smul.addr %s426, 24
          %s428 = scalar_lea.vmem [#allocation2], %s427
          %429 = dma.done %s425, 384
        $region44: #{tpu_custom_call.1} parent=39 // pred_fallthru
          _
      $region40: #{tpu_custom_call.1} parent=5 // pred_fallthru
        _
    $region6: #{tpu_custom_call.1} parent=1 // loop_footer
      %s15 = sadd.s32 1, %s11
    $region7: #{tpu_custom_call.1} parent=1 // loop_footer_branch
      %10 = sbr.rel target = $region3
    $region8: #{tpu_custom_call.1} parent=1 // loop_exit
      _
    %430 = vsyncpa [#allocation3], 1
    %s431 = scalar_lea.sflag [#allocation3], 1
    %432 = vsyncpa %s431, 1

</llo_original>
